<compile_context>
chip_gen: v7x
topology: tpu7x:2x2x1
jax: 0.10.0
libtpu: 0.0.40
codegen_flags: <defaults>
</compile_context>

<pallas_src>
import math
import functools

import numpy as np
import jax
import jax.numpy as jnp
from jax.experimental import pallas as pl
from jax.experimental.pallas import tpu as pltpu

_LOG_HALF = math.log(0.5)   # log_g(0): constant initial hidden state used by minLSTM
_LANE = 128                 # TPU lane width; each gate slab is padded up to a multiple of this


def _log_g(x):
    # torch: where(x >= 0, log(relu(x) + 0.5), -softplus(-x))
    return jnp.where(x >= 0, jnp.log(jnp.maximum(x, 0.0) + 0.5), -jax.nn.softplus(-x))


def _gate_slab(exp_dim):
    # lane-aligned width of one gate slab
    return ((exp_dim + _LANE - 1) // _LANE) * _LANE


def _build_scan_masks(batch, seq_len, slab):
    """(num_steps, B*T, slab) f32 masks for the segmented Hillis-Steele scan (host-side numpy)."""
    num_steps = max(1, (seq_len - 1).bit_length())            # ceil(log2(T)), at least 1
    pos = np.arange(batch * seq_len) % seq_len                # position inside each batch segment
    masks = np.stack([(pos >= (1 << s)).astype(np.float32) for s in range(num_steps)])
    return np.ascontiguousarray(
        np.broadcast_to(masks[:, :, None], (num_steps, batch * seq_len, slab)))


# ------------------------------- fused minLSTM kernel --------------------------------
def _minlstm_fused_kernel(x_ref, w_ref, b_ref, masks_ref, o_ref):
    """x_ref: (B*T, D); w_ref: (D, 3*slab) pre-transposed & lane-aligned; b_ref: (1, 3*slab);
    masks_ref: (num_steps, B*T, slab) precomputed scan masks; o_ref: (B*T, E)."""
    E = o_ref.shape[1]
    slab = w_ref.shape[1] // 3
    num_steps = masks_ref.shape[0]

    x = x_ref[...].astype(jnp.float32)

    # One MXU push for all three gate projections; each gate slab starts on a 128-lane boundary,
    # so the three slices below are vreg-aligned (no lane relayout to extract the gates).
    k = jnp.dot(x, w_ref[...], preferred_element_type=jnp.float32) + b_ref[...]
    k_f = k[:, 0 * slab:1 * slab]
    k_i = k[:, 1 * slab:2 * slab]
    k_h = k[:, 2 * slab:3 * slab]

    log_f = -jax.nn.softplus(-k_f)
    log_i = -jax.nn.softplus(-k_i)
    log_th = _log_g(k_h)

    # Segmented (per-batch) inclusive prefix sum along time: log2(T) XLU sublane rolls + VPU adds,
    # gated by precomputed masks so carries never cross a batch boundary.  Replaces the previous
    # two strictly-serial MXU tril matmuls (and the in-kernel iota/div/select mask build).
    def seg_scan(v):
        acc = v
        for s in range(num_steps):
            acc = acc + pltpu.roll(acc, shift=1 << s, axis=0) * masks_ref[s]
        return acc

    # parallel_scan_log:
    #   a[b,t] = sum_{s<=t} log_f[b,s]        d[b,t] = (log_i + log_tilde_h)[b,t] - a[b,t]
    #   h[b,t] = exp(a[b,t]) * ( exp(log 0.5) + sum_{s<=t} exp(d[b,s]) )   (stabilised by m)
    a = seg_scan(log_f)
    d = (log_i + log_th) - a
    # Per-feature stabiliser m shared across the folded batches/timesteps; algebra exact for any m.
    # TODO(synk): long sequences need a chunked scan with a carried (m, partial-sum) pair.
    m = jnp.maximum(jnp.max(d, axis=0, keepdims=True), _LOG_HALF)
    csum = seg_scan(jnp.exp(d - m)) + jnp.exp(_LOG_HALF - m)   # + initial-state term h0 = 0.5
    h = jnp.exp(a + m) * csum

    # TODO(synk): output last dim is E=32 (<128 lanes) -> masked stores; a lane-dense repack is
    # not worth the relayout at this size, revisit if E or B*T grows.
    o_ref[...] = h[:, :E].astype(o_ref.dtype)


# ------------------------------------- wrapper ---------------------------------------
@functools.partial(jax.jit, static_argnames=("exp_dim",))
def minlstm_forward(x, params, *, exp_dim):
    """x: (B, T, D) float32.  params: {'w_t': (D, 3*slab), 'b': (1, 3*slab)} (padded once)."""
    B, T, D = x.shape
    w_t, b = params["w_t"], params["b"]
    slab = w_t.shape[1] // 3

    x2d = x.reshape(B * T, D)                                   # free reshape
    masks = jnp.asarray(_build_scan_masks(B, T, slab))          # trace-time constant under jit

    vmem = pl.BlockSpec(memory_space=pltpu.MemorySpace.VMEM)
    h2d = pl.pallas_call(
        _minlstm_fused_kernel,
        out_shape=jax.ShapeDtypeStruct((B * T, exp_dim), x.dtype),
        in_specs=[vmem, vmem, vmem, vmem],
        out_specs=vmem,
    )(x2d, w_t, b, masks)
    # dropout=0.0 -> drop_f / drop_proj are identity; expansion_factor=1.0 -> no down_projection.
    return h2d.reshape(B, T, exp_dim)


# -------------------------- parameters (PyTorch nn.Linear init) -----------------------
def init_params(key, dim, exp_dim):
    """nn.Linear(dim, 3*exp_dim) init, then pre-transpose + lane-align ONCE (no per-call layout)."""
    kw, kb = jax.random.split(key)
    s = 1.0 / math.sqrt(dim)
    w = jax.random.uniform(kw, (3 * exp_dim, dim), jnp.float32, -s, s)   # torch layout (3E, D)
    b = jax.random.uniform(kb, (3 * exp_dim,), jnp.float32, -s, s)
    slab = _gate_slab(exp_dim)
    w_t = jnp.zeros((dim, 3 * slab), jnp.float32)
    b_pad = jnp.zeros((1, 3 * slab), jnp.float32)
    for g in range(3):                                                    # gate order: f, i, h
        w_t = w_t.at[:, g * slab:g * slab + exp_dim].set(
            jnp.transpose(w[g * exp_dim:(g + 1) * exp_dim, :]))
        b_pad = b_pad.at[:, g * slab:g * slab + exp_dim].set(b[g * exp_dim:(g + 1) * exp_dim])
    return {"w_t": w_t, "b": b_pad}


# --------------------------- pure-JAX reference (torch math) --------------------------
def _reference_forward(x, params, exp_dim):
    w_t, b = params["w_t"], params["b"]
    slab = w_t.shape[1] // 3
    w = jnp.concatenate([w_t[:, g * slab:g * slab + exp_dim] for g in range(3)], axis=1)
    bias = jnp.concatenate([b[:, g * slab:g * slab + exp_dim] for g in range(3)], axis=1)
    k = jnp.einsum("btd,de->bte", x, w) + bias
    k_f, k_i, k_h = k[..., :exp_dim], k[..., exp_dim:2 * exp_dim], k[..., 2 * exp_dim:]
    log_f = -jax.nn.softplus(-k_f)
    log_i = -jax.nn.softplus(-k_i)
    log_th = _log_g(k_h)
    B, T, E = log_f.shape
    a_star = jnp.pad(jnp.cumsum(log_f, axis=1), ((0, 0), (1, 0), (0, 0)))
    log_vals = jnp.concatenate(
        [jnp.full((B, 1, E), _LOG_HALF, jnp.float32), log_i + log_th], axis=1)
    log_h = a_star + jax.lax.cumlogsumexp(log_vals - a_star, axis=1)
    return jnp.exp(log_h)[:, 1:]


if __name__ == "__main__":
    B, T, DIM = 2, 8, 32
    key = jax.random.PRNGKey(0)
    kx, kp = jax.random.split(key)
    x = jax.random.normal(kx, (B, T, DIM), jnp.float32)
    params = init_params(kp, DIM, DIM)        # expansion_factor = 1.0 -> exp_dim == dim

    out = minlstm_forward(x, params, exp_dim=DIM)
    jax.block_until_ready(out)
    assert out.shape == (B, T, DIM) and out.dtype == jnp.float32

    ref = _reference_forward(x, params, DIM)
    err = float(jnp.max(jnp.abs(out - ref)))
    assert jnp.allclose(out, ref, rtol=1e-3, atol=1e-4), err
    print("KERNEL_OK")
</pallas_src>

<mosaic_0001>
module attributes {stable_mosaic.version = 11 : i64} {
  func.func @_minlstm_fused_kernel(%arg0: memref<16x32xf32, #tpu.memory_space<vmem>>, %arg1: memref<32x384xf32, #tpu.memory_space<vmem>>, %arg2: memref<1x384xf32, #tpu.memory_space<vmem>>, %arg3: memref<3x16x128xf32, #tpu.memory_space<vmem>>, %arg4: memref<16x32xf32, #tpu.memory_space<vmem>>) attributes {dimension_semantics = [], scalar_prefetch = 0 : i64, scratch_operands = 0 : i64, tpu.core_type = #tpu.core_type<tc>} {
    %c0 = arith.constant 0 : index
    %c0_0 = arith.constant 0 : index
    %0 = vector.load %arg0[%c0, %c0_0] : memref<16x32xf32, #tpu.memory_space<vmem>>, vector<16x32xf32>
    %c0_1 = arith.constant 0 : index
    %c0_2 = arith.constant 0 : index
    %1 = vector.load %arg1[%c0_1, %c0_2] : memref<32x384xf32, #tpu.memory_space<vmem>>, vector<32x384xf32>
    %cst = arith.constant dense<0.000000e+00> : vector<16x384xf32>
    %2 = tpu.matmul %0, %1, %cst {dimension_numbers = #tpu.dot_dimension_numbers<[1], [0], [0], [1], [0, 0, 1, 1], [], []>} : vector<16x32xf32>, vector<32x384xf32>, vector<16x384xf32> -> vector<16x384xf32>
    %c0_3 = arith.constant 0 : index
    %c0_4 = arith.constant 0 : index
    %3 = vector.load %arg2[%c0_3, %c0_4] : memref<1x384xf32, #tpu.memory_space<vmem>>, vector<1x384xf32>
    %4 = vector.broadcast %3 : vector<1x384xf32> to vector<16x384xf32>
    %5 = arith.addf %2, %4 : vector<16x384xf32>
    %6 = vector.extract_strided_slice %5 {offsets = [0, 0], sizes = [16, 128], strides = [1, 1]} : vector<16x384xf32> to vector<16x128xf32>
    %7 = vector.extract_strided_slice %5 {offsets = [0, 128], sizes = [16, 128], strides = [1, 1]} : vector<16x384xf32> to vector<16x128xf32>
    %8 = vector.extract_strided_slice %5 {offsets = [0, 256], sizes = [16, 128], strides = [1, 1]} : vector<16x384xf32> to vector<16x128xf32>
    %cst_5 = arith.constant 0.000000e+00 : f32
    %9 = vector.broadcast %cst_5 : f32 to vector<16x128xf32>
    %10 = arith.subf %9, %6 : vector<16x128xf32>
    %cst_6 = arith.constant 0.000000e+00 : f32
    %11 = vector.broadcast %cst_6 : f32 to vector<16x128xf32>
    %12 = arith.maximumf %10, %11 : vector<16x128xf32>
    %13 = vector.broadcast %cst_6 : f32 to vector<16x128xf32>
    %14 = arith.subf %10, %13 : vector<16x128xf32>
    %15 = arith.cmpf one, %14, %14 : vector<16x128xf32>
    %16 = vector.broadcast %cst_6 : f32 to vector<16x128xf32>
    %17 = arith.addf %10, %16 : vector<16x128xf32>
    %18 = math.absf %14 : vector<16x128xf32>
    %cst_7 = arith.constant 0.000000e+00 : f32
    %19 = vector.broadcast %cst_7 : f32 to vector<16x128xf32>
    %20 = arith.subf %19, %18 : vector<16x128xf32>
    %21 = math.exp %20 : vector<16x128xf32>
    %22 = math.log1p %21 : vector<16x128xf32>
    %23 = arith.addf %12, %22 : vector<16x128xf32>
    %24 = arith.select %15, %17, %23 : vector<16x128xi1>, vector<16x128xf32>
    %cst_8 = arith.constant 0.000000e+00 : f32
    %25 = vector.broadcast %cst_8 : f32 to vector<16x128xf32>
    %26 = arith.subf %25, %24 : vector<16x128xf32>
    %cst_9 = arith.constant 0.000000e+00 : f32
    %27 = vector.broadcast %cst_9 : f32 to vector<16x128xf32>
    %28 = arith.subf %27, %7 : vector<16x128xf32>
    %cst_10 = arith.constant 0.000000e+00 : f32
    %29 = vector.broadcast %cst_10 : f32 to vector<16x128xf32>
    %30 = arith.maximumf %28, %29 : vector<16x128xf32>
    %31 = vector.broadcast %cst_10 : f32 to vector<16x128xf32>
    %32 = arith.subf %28, %31 : vector<16x128xf32>
    %33 = arith.cmpf one, %32, %32 : vector<16x128xf32>
    %34 = vector.broadcast %cst_10 : f32 to vector<16x128xf32>
    %35 = arith.addf %28, %34 : vector<16x128xf32>
    %36 = math.absf %32 : vector<16x128xf32>
    %cst_11 = arith.constant 0.000000e+00 : f32
    %37 = vector.broadcast %cst_11 : f32 to vector<16x128xf32>
    %38 = arith.subf %37, %36 : vector<16x128xf32>
    %39 = math.exp %38 : vector<16x128xf32>
    %40 = math.log1p %39 : vector<16x128xf32>
    %41 = arith.addf %30, %40 : vector<16x128xf32>
    %42 = arith.select %33, %35, %41 : vector<16x128xi1>, vector<16x128xf32>
    %cst_12 = arith.constant 0.000000e+00 : f32
    %43 = vector.broadcast %cst_12 : f32 to vector<16x128xf32>
    %44 = arith.subf %43, %42 : vector<16x128xf32>
    %cst_13 = arith.constant 0.000000e+00 : f32
    %45 = vector.broadcast %cst_13 : f32 to vector<16x128xf32>
    %46 = arith.cmpf oge, %8, %45 : vector<16x128xf32>
    %cst_14 = arith.constant 0.000000e+00 : f32
    %47 = vector.broadcast %cst_14 : f32 to vector<16x128xf32>
    %48 = arith.maximumf %8, %47 : vector<16x128xf32>
    %cst_15 = arith.constant 5.000000e-01 : f32
    %49 = vector.broadcast %cst_15 : f32 to vector<16x128xf32>
    %50 = arith.addf %48, %49 : vector<16x128xf32>
    %51 = math.log %50 : vector<16x128xf32>
    %cst_16 = arith.constant 0.000000e+00 : f32
    %52 = vector.broadcast %cst_16 : f32 to vector<16x128xf32>
    %53 = arith.subf %52, %8 : vector<16x128xf32>
    %cst_17 = arith.constant 0.000000e+00 : f32
    %54 = vector.broadcast %cst_17 : f32 to vector<16x128xf32>
    %55 = arith.maximumf %53, %54 : vector<16x128xf32>
    %56 = vector.broadcast %cst_17 : f32 to vector<16x128xf32>
    %57 = arith.subf %53, %56 : vector<16x128xf32>
    %58 = arith.cmpf one, %57, %57 : vector<16x128xf32>
    %59 = vector.broadcast %cst_17 : f32 to vector<16x128xf32>
    %60 = arith.addf %53, %59 : vector<16x128xf32>
    %61 = math.absf %57 : vector<16x128xf32>
    %cst_18 = arith.constant 0.000000e+00 : f32
    %62 = vector.broadcast %cst_18 : f32 to vector<16x128xf32>
    %63 = arith.subf %62, %61 : vector<16x128xf32>
    %64 = math.exp %63 : vector<16x128xf32>
    %65 = math.log1p %64 : vector<16x128xf32>
    %66 = arith.addf %55, %65 : vector<16x128xf32>
    %67 = arith.select %58, %60, %66 : vector<16x128xi1>, vector<16x128xf32>
    %cst_19 = arith.constant 0.000000e+00 : f32
    %68 = vector.broadcast %cst_19 : f32 to vector<16x128xf32>
    %69 = arith.subf %68, %67 : vector<16x128xf32>
    %70 = arith.select %46, %51, %69 : vector<16x128xi1>, vector<16x128xf32>
    %c1_i32 = arith.constant 1 : i32
    %71 = tpu.dynamic_rotate %26 by %c1_i32 dim 0 : vector<16x128xf32>, i32 -> vector<16x128xf32>
    %c0_20 = arith.constant 0 : index
    %c0_21 = arith.constant 0 : index
    %c0_22 = arith.constant 0 : index
    %72 = vector.load %arg3[%c0_20, %c0_21, %c0_22] : memref<3x16x128xf32, #tpu.memory_space<vmem>>, vector<1x16x128xf32>
    %73 = vector.shape_cast %72 : vector<1x16x128xf32> to vector<16x128xf32>
    %74 = arith.mulf %71, %73 : vector<16x128xf32>
    %75 = arith.addf %26, %74 : vector<16x128xf32>
    %c2_i32 = arith.constant 2 : i32
    %76 = tpu.dynamic_rotate %75 by %c2_i32 dim 0 : vector<16x128xf32>, i32 -> vector<16x128xf32>
    %c1 = arith.constant 1 : index
    %c0_23 = arith.constant 0 : index
    %c0_24 = arith.constant 0 : index
    %77 = vector.load %arg3[%c1, %c0_23, %c0_24] : memref<3x16x128xf32, #tpu.memory_space<vmem>>, vector<1x16x128xf32>
    %78 = vector.shape_cast %77 : vector<1x16x128xf32> to vector<16x128xf32>
    %79 = arith.mulf %76, %78 : vector<16x128xf32>
    %80 = arith.addf %75, %79 : vector<16x128xf32>
    %c4_i32 = arith.constant 4 : i32
    %81 = tpu.dynamic_rotate %80 by %c4_i32 dim 0 : vector<16x128xf32>, i32 -> vector<16x128xf32>
    %c2 = arith.constant 2 : index
    %c0_25 = arith.constant 0 : index
    %c0_26 = arith.constant 0 : index
    %82 = vector.load %arg3[%c2, %c0_25, %c0_26] : memref<3x16x128xf32, #tpu.memory_space<vmem>>, vector<1x16x128xf32>
    %83 = vector.shape_cast %82 : vector<1x16x128xf32> to vector<16x128xf32>
    %84 = arith.mulf %81, %83 : vector<16x128xf32>
    %85 = arith.addf %80, %84 : vector<16x128xf32>
    %86 = arith.addf %44, %70 : vector<16x128xf32>
    %87 = arith.subf %86, %85 : vector<16x128xf32>
    %cst_27 = arith.constant dense<0xFF800000> : vector<128xf32>
    %88 = vector.multi_reduction <maximumf>, %87, %cst_27 [0] : vector<16x128xf32> to vector<128xf32>
    %89 = vector.shape_cast %88 : vector<128xf32> to vector<1x128xf32>
    %cst_28 = arith.constant -0.693147182 : f32
    %90 = vector.broadcast %cst_28 : f32 to vector<1x128xf32>
    %91 = arith.maximumf %89, %90 : vector<1x128xf32>
    %92 = vector.broadcast %91 : vector<1x128xf32> to vector<16x128xf32>
    %93 = arith.subf %87, %92 : vector<16x128xf32>
    %94 = math.exp %93 : vector<16x128xf32>
    %c1_i32_29 = arith.constant 1 : i32
    %95 = tpu.dynamic_rotate %94 by %c1_i32_29 dim 0 : vector<16x128xf32>, i32 -> vector<16x128xf32>
    %c0_30 = arith.constant 0 : index
    %c0_31 = arith.constant 0 : index
    %c0_32 = arith.constant 0 : index
    %96 = vector.load %arg3[%c0_30, %c0_31, %c0_32] : memref<3x16x128xf32, #tpu.memory_space<vmem>>, vector<1x16x128xf32>
    %97 = vector.shape_cast %96 : vector<1x16x128xf32> to vector<16x128xf32>
    %98 = arith.mulf %95, %97 : vector<16x128xf32>
    %99 = arith.addf %94, %98 : vector<16x128xf32>
    %c2_i32_33 = arith.constant 2 : i32
    %100 = tpu.dynamic_rotate %99 by %c2_i32_33 dim 0 : vector<16x128xf32>, i32 -> vector<16x128xf32>
    %c1_34 = arith.constant 1 : index
    %c0_35 = arith.constant 0 : index
    %c0_36 = arith.constant 0 : index
    %101 = vector.load %arg3[%c1_34, %c0_35, %c0_36] : memref<3x16x128xf32, #tpu.memory_space<vmem>>, vector<1x16x128xf32>
    %102 = vector.shape_cast %101 : vector<1x16x128xf32> to vector<16x128xf32>
    %103 = arith.mulf %100, %102 : vector<16x128xf32>
    %104 = arith.addf %99, %103 : vector<16x128xf32>
    %c4_i32_37 = arith.constant 4 : i32
    %105 = tpu.dynamic_rotate %104 by %c4_i32_37 dim 0 : vector<16x128xf32>, i32 -> vector<16x128xf32>
    %c2_38 = arith.constant 2 : index
    %c0_39 = arith.constant 0 : index
    %c0_40 = arith.constant 0 : index
    %106 = vector.load %arg3[%c2_38, %c0_39, %c0_40] : memref<3x16x128xf32, #tpu.memory_space<vmem>>, vector<1x16x128xf32>
    %107 = vector.shape_cast %106 : vector<1x16x128xf32> to vector<16x128xf32>
    %108 = arith.mulf %105, %107 : vector<16x128xf32>
    %109 = arith.addf %104, %108 : vector<16x128xf32>
    %cst_41 = arith.constant -0.693147182 : f32
    %110 = vector.broadcast %cst_41 : f32 to vector<1x128xf32>
    %111 = arith.subf %110, %91 : vector<1x128xf32>
    %112 = math.exp %111 : vector<1x128xf32>
    %113 = vector.broadcast %112 : vector<1x128xf32> to vector<16x128xf32>
    %114 = arith.addf %109, %113 : vector<16x128xf32>
    %115 = vector.broadcast %91 : vector<1x128xf32> to vector<16x128xf32>
    %116 = arith.addf %85, %115 : vector<16x128xf32>
    %117 = math.exp %116 : vector<16x128xf32>
    %118 = arith.mulf %117, %114 : vector<16x128xf32>
    %119 = vector.extract_strided_slice %118 {offsets = [0, 0], sizes = [16, 32], strides = [1, 1]} : vector<16x128xf32> to vector<16x32xf32>
    %c0_42 = arith.constant 0 : index
    %c0_43 = arith.constant 0 : index
    %120 = vector.load %arg4[%c0_42, %c0_43] : memref<16x32xf32, #tpu.memory_space<vmem>>, vector<16x32xf32>
    tpu.vector_store %arg4[%c0_42, %c0_43], %119 {strides = array<i32>} : memref<16x32xf32, #tpu.memory_space<vmem>>, vector<16x32xf32>,
    return
  }
}

</mosaic_0001>

<llo_original>
// kernel: minlstm_forward.1
$region0: #{minlstm_forward.1}
  #allocation0 [shape = 'u32[]', space=smem, size = 0x4, offset = 0x4, fixed_abs, tag = 'smem constant byte address 0x4 - core index']
  #allocation1 [shape = 'u32[144,128]{1,0:T(1,128)}', space=vmem, size = 0x12000, scoped, tag = 'internal scratch']
  %s0 = inlined_call_operand.hbm [shape: f32[16,32], index: 0, kind: input, shape index: {}]
  %s1 = inlined_call_operand.hbm [shape: f32[32,384], index: 1, kind: input, shape index: {}]
  %s2 = inlined_call_operand.vmem [shape: f32[1,384], index: 2, kind: input, shape index: {}]
  %s3 = inlined_call_operand.hbm [shape: f32[3,16,128], index: 3, kind: input, shape index: {}]
  %s4 = inlined_call_operand.hbm [shape: f32[16,32], index: 4, kind: output, shape index: {}]
  %s5 = sld [smem:[#allocation0]]
  $region38: #{minlstm_forward.1} parent=0
    _
  %s7 = ssub.s32 1, %s5
  %s8 = scalar_select 0, %s7, %s5
  $region1: #{minlstm_forward.1} parent=0
    #allocation2 [shape = 'u8[8192]{0}', space=vmem, size = 0x2000, scoped, tag = 'input window, operand 0, single buffered']
    #allocation3 [shape = 's32[1]{0}', space=sflag, size = 0x4, scoped, tag = 'scoped memory for minlstm_forward.1']
    #allocation4 [shape = 's32[1]{0}', space=sflag, size = 0x4, scoped, tag = 'scoped memory for minlstm_forward.1']
    #allocation5 [shape = 'u8[49152]{0}', space=vmem, size = 0xc000, scoped, tag = 'input window, operand 1, single buffered']
    #allocation6 [shape = 's32[1]{0}', space=sflag, size = 0x4, scoped, tag = 'scoped memory for minlstm_forward.1']
    #allocation7 [shape = 'u8[24576]{0}', space=vmem, size = 0x6000, scoped, tag = 'input window, operand 3, single buffered']
    #allocation8 [shape = 'u8[8192]{0}', space=vmem, size = 0x2000, scoped, tag = 'output window, operand 0, single buffered']
    %9 = vsyncpa [#allocation3], 0
    %10 = vsyncpa [#allocation6], 0
    %11 = vsyncpa [#allocation4], 0
    // Predicated region
    $region2: #{minlstm_forward.1} parent=1 // pred_check
      _
    $region3: #{minlstm_forward.1} parent=1 // pred_check_branch
      %13 = sbr.rel (0) target = $region5
    $region4: #{minlstm_forward.1} parent=1 // pred_region
      %s15 = ssub.s32 256, 256
      %16 = vsyncadd [#allocation3], %s15
      %s17 = sshll.u32 [#allocation2], 4
      %s18 = int_to_ptr.vmem [resolvable:$true] %s17
      %23 = dma.hbm_to_vmem [thread:$0]  %s0, 256, %s18, [#allocation3], 128, 128, 8
    $region5: #{minlstm_forward.1} parent=1 // pred_fallthru
      _
    // Predicated region
    $region6: #{minlstm_forward.1} parent=1 // pred_check
      _
    $region7: #{minlstm_forward.1} parent=1 // pred_check_branch
      %25 = sbr.rel (0) target = $region9
    $region8: #{minlstm_forward.1} parent=1 // pred_region
      %s27 = ssub.s32 1536, 1536
      %28 = vsyncadd [#allocation6], %s27
      %s29 = sshll.u32 [#allocation5], 4
      %s30 = int_to_ptr.vmem [resolvable:$true] %s29
      %35 = dma.hbm_to_vmem [thread:$0]  %s1, 1536, %s30, [#allocation6], 384, 384, 24
    $region9: #{minlstm_forward.1} parent=1 // pred_fallthru
      _
    // Predicated region
    $region10: #{minlstm_forward.1} parent=1 // pred_check
      _
    $region11: #{minlstm_forward.1} parent=1 // pred_check_branch
      %37 = sbr.rel (0) target = $region13
    $region12: #{minlstm_forward.1} parent=1 // pred_region
      _
    $region13: #{minlstm_forward.1} parent=1 // pred_fallthru
      _
    // Predicated region
    $region14: #{minlstm_forward.1} parent=1 // pred_check
      _
    $region15: #{minlstm_forward.1} parent=1 // pred_check_branch
      %39 = sbr.rel (0) target = $region17
    $region16: #{minlstm_forward.1} parent=1 // pred_region
      %s41 = ssub.s32 768, 768
      %42 = vsyncadd [#allocation6], %s41
      %s43 = sshll.u32 [#allocation7], 4
      %s44 = int_to_ptr.vmem [resolvable:$true] %s43
      %49 = dma.hbm_to_vmem [thread:$0]  %s3, 768, %s44, [#allocation6], 128, 128, 8
    $region17: #{minlstm_forward.1} parent=1 // pred_fallthru
      _
    // Predicated region
    $region18: #{minlstm_forward.1} parent=1 // pred_check
      _
    $region19: #{minlstm_forward.1} parent=1 // pred_check_branch
      %51 = sbr.rel (0) target = $region21
    $region20: #{minlstm_forward.1} parent=1 // pred_region
      %52 = dma.done [#allocation3], 256
    $region21: #{minlstm_forward.1} parent=1 // pred_fallthru
      _
    // Predicated region
    $region22: #{minlstm_forward.1} parent=1 // pred_check
      _
    $region23: #{minlstm_forward.1} parent=1 // pred_check_branch
      %54 = sbr.rel (0) target = $region25
    $region24: #{minlstm_forward.1} parent=1 // pred_region
      %55 = dma.done [#allocation6], 1536
    $region25: #{minlstm_forward.1} parent=1 // pred_fallthru
      _
    // Predicated region
    $region26: #{minlstm_forward.1} parent=1 // pred_check
      _
    $region27: #{minlstm_forward.1} parent=1 // pred_check_branch
      %57 = sbr.rel (0) target = $region29
    $region28: #{minlstm_forward.1} parent=1 // pred_region
      %58 = dma.done [#allocation6], 768
    $region29: #{minlstm_forward.1} parent=1 // pred_fallthru
      _
    %v59 = vld [vmem:[#allocation2] sm:$0xff]
    %v60 = vld [vmem:[#allocation2 + $0x8] sm:$0xff]
    %v61 = vld [vmem:[#allocation5] sm:$0xff]
    %v62 = vld [vmem:[#allocation5 + $0x8] sm:$0xff]
    %v63 = vld [vmem:[#allocation5 + $0x10] sm:$0xff]
    %v64 = vld [vmem:[#allocation5 + $0x18] sm:$0xff]
    %v65 = vld [vmem:[#allocation5 + $0x20] sm:$0xff]
    %v66 = vld [vmem:[#allocation5 + $0x28] sm:$0xff]
    %v67 = vld [vmem:[#allocation5 + $0x30] sm:$0xff]
    %v68 = vld [vmem:[#allocation5 + $0x38] sm:$0xff]
    %v69 = vld [vmem:[#allocation5 + $0x40] sm:$0xff]
    %v70 = vld [vmem:[#allocation5 + $0x48] sm:$0xff]
    %v71 = vld [vmem:[#allocation5 + $0x50] sm:$0xff]
    %v72 = vld [vmem:[#allocation5 + $0x58] sm:$0xff]
    %v73 = vld [vmem:[%s2] sm:$0x7]
    %v75 = vlaneseq
    %v76 = vshrl.u32 %v75, 7
    %v77 = vsub.s32 0, %v76
    %v78 = vrot.slane %v73, %v77
    %v79 = vlaneseq
    %v80 = vshrl.u32 %v79, 7
    %v81 = vsub.s32 1, %v80
    %v82 = vrot.slane %v73, %v81
    %v83 = vlaneseq
    %v84 = vshrl.u32 %v83, 7
    %v85 = vsub.s32 2, %v84
    %v86 = vrot.slane %v73, %v85
    %vm90 = vcmask 261120
    %v92 = vsel %vm90, %v59, 0
    %v95 = vsel %vm90, %v60, 0
    %97 = vmatprep.subr.mxu0 %v62
    %98 = vmatpush1.msra.mxu0 %v61
    %99 = vmatprep.subr.mxu0 %v65
    %100 = vmatpush1.msra.mxu0 %v64
    %101 = vmatprep.subr.mxu0 %v68
    %102 = vmatpush1.msra.mxu0 %v67
    %103 = vmatprep.subr.mxu0 %v71
    %104 = vmatpush1.msra.mxu0 %v70
    %105 = vmatprep.subr.mxu0 0.0
    %106 = vmatpush1.msra.mxu0 0.0
    %107 = vmatprep.subr.mxu0 0.0
    %108 = vmatpush1.msra.mxu0 0.0
    %109 = vmatprep.subr.mxu0 0.0
    %110 = vmatpush1.msra.mxu0 0.0
    %111 = vmatprep.subr.mxu0 0.0
    %112 = vmatpush1.msra.mxu0 0.0
    %113 = vmatprep.subr.mxu0 0.0
    %114 = vmatpush1.msra.mxu0 0.0
    %115 = vmatprep.subr.mxu0 0.0
    %116 = vmatpush1.msra.mxu0 0.0
    %117 = vmatprep.subr.mxu0 0.0
    %118 = vmatpush1.msra.mxu0 0.0
    %119 = vmatprep.subr.mxu0 0.0
    %120 = vmatpush1.msra.mxu0 0.0
    %121 = vmatprep.subr.mxu0 0.0
    %122 = vmatpush1.msra.mxu0 0.0
    %123 = vmatprep.subr.mxu0 0.0
    %124 = vmatpush1.msra.mxu0 0.0
    %125 = vmatprep.subr.mxu0 0.0
    %126 = vmatpush1.msra.mxu0 0.0
    %127 = vmatprep.subr.mxu0 0.0
    %128 = vmatpush1.msra.mxu0 0.0
    %129 = vmatprep.subr.mxu0 0.0
    %130 = vmatpush1.msra.mxu0 0.0
    %131 = vmatprep.subr.mxu0 0.0
    %132 = vmatpush1.msra.mxu0 0.0
    %133 = vmatprep.subr.mxu0 0.0
    %134 = vmatpush1.msra.mxu0 0.0
    %135 = vmatprep.subr.mxu0 0.0
    %136 = vmatpush1.msra.mxu0 0.0
    %137 = vmatprep.subr.mxu0 0.0
    %138 = vmatpush1.msra.mxu0 0.0
    %139 = vmatprep.subr.mxu0 0.0
    %140 = vmatpush1.msra.mxu0 0.0
    %141 = vmatprep.subr.mxu0 0.0
    %142 = vmatpush1.msra.mxu0 0.0
    %143 = vmatprep.subr.mxu0 0.0
    %144 = vmatpush1.msra.mxu0 0.0
    %145 = vmatprep.subr.mxu0 0.0
    %146 = vmatpush1.msra.mxu0 0.0
    %147 = vmatprep.subr.mxu0 0.0
    %148 = vmatpush1.msra.mxu0 0.0
    %149 = vmatprep.subr.mxu0 0.0
    %150 = vmatpush1.msra.mxu0 0.0
    %151 = vmatprep.subr.mxu0 0.0
    %152 = vmatpush1.msra.mxu0 0.0
    %153 = vmatprep.subr.mxu0 0.0
    %154 = vmatpush1.msra.mxu0 0.0
    %155 = vmatprep.subr.mxu0 0.0
    %156 = vmatpush1.msra.mxu0 0.0
    %157 = vmatprep.subr.mxu0 0.0
    %158 = vmatpush1.msra.mxu0 0.0
    %159 = vmatprep.subr.mxu0 0.0
    %160 = vmatpush1.msra.mxu0 0.0
    %161 = vmatprep.mubr.f32.mxu0 0.0
    %162 = vmatmul.mubr.f32.gmra.mrb[0].mxu0 %v92
    %v163 = vpop.f32.mrb[0].mxu0
    %v164 = vadd.f32 %v78, %v163
    %v165 = vpop.f32.mrb[0].mxu0
    %v166 = vadd.f32 %v82, %v165
    %167 = vmatprep.mubr.f32.mxu0 0.0
    %168 = vmatmul.mubr.f32.gmra.mrb[0].mxu0 %v95
    %v169 = vpop.f32.mrb[0].mxu0
    %v170 = vadd.f32 %v78, %v169
    %v171 = vpop.f32.mrb[0].mxu0
    %v172 = vadd.f32 %v82, %v171
    %173 = vdwg.mxu0
    %174 = vmatprep.subr.mxu0 0.0
    %175 = vmatpush1.msra.mxu0 %v63
    %176 = vmatprep.subr.mxu0 0.0
    %177 = vmatpush1.msra.mxu0 %v66
    %178 = vmatprep.subr.mxu0 0.0
    %179 = vmatpush1.msra.mxu0 %v69
    %180 = vmatprep.subr.mxu0 0.0
    %181 = vmatpush1.msra.mxu0 %v72
    %182 = vmatprep.subr.mxu0 0.0
    %183 = vmatpush1.msra.mxu0 0.0
    %184 = vmatprep.subr.mxu0 0.0
    %185 = vmatpush1.msra.mxu0 0.0
    %186 = vmatprep.subr.mxu0 0.0
    %187 = vmatpush1.msra.mxu0 0.0
    %188 = vmatprep.subr.mxu0 0.0
    %189 = vmatpush1.msra.mxu0 0.0
    %190 = vmatprep.subr.mxu0 0.0
    %191 = vmatpush1.msra.mxu0 0.0
    %192 = vmatprep.subr.mxu0 0.0
    %193 = vmatpush1.msra.mxu0 0.0
    %194 = vmatprep.subr.mxu0 0.0
    %195 = vmatpush1.msra.mxu0 0.0
    %196 = vmatprep.subr.mxu0 0.0
    %197 = vmatpush1.msra.mxu0 0.0
    %198 = vmatprep.subr.mxu0 0.0
    %199 = vmatpush1.msra.mxu0 0.0
    %200 = vmatprep.subr.mxu0 0.0
    %201 = vmatpush1.msra.mxu0 0.0
    %202 = vmatprep.subr.mxu0 0.0
    %203 = vmatpush1.msra.mxu0 0.0
    %204 = vmatprep.subr.mxu0 0.0
    %205 = vmatpush1.msra.mxu0 0.0
    %206 = vmatprep.subr.mxu0 0.0
    %207 = vmatpush1.msra.mxu0 0.0
    %208 = vmatprep.subr.mxu0 0.0
    %209 = vmatpush1.msra.mxu0 0.0
    %210 = vmatprep.subr.mxu0 0.0
    %211 = vmatpush1.msra.mxu0 0.0
    %212 = vmatprep.subr.mxu0 0.0
    %213 = vmatpush1.msra.mxu0 0.0
    %214 = vmatprep.subr.mxu0 0.0
    %215 = vmatpush1.msra.mxu0 0.0
    %216 = vmatprep.subr.mxu0 0.0
    %217 = vmatpush1.msra.mxu0 0.0
    %218 = vmatprep.subr.mxu0 0.0
    %219 = vmatpush1.msra.mxu0 0.0
    %220 = vmatprep.subr.mxu0 0.0
    %221 = vmatpush1.msra.mxu0 0.0
    %222 = vmatprep.subr.mxu0 0.0
    %223 = vmatpush1.msra.mxu0 0.0
    %224 = vmatprep.subr.mxu0 0.0
    %225 = vmatpush1.msra.mxu0 0.0
    %226 = vmatprep.subr.mxu0 0.0
    %227 = vmatpush1.msra.mxu0 0.0
    %228 = vmatprep.subr.mxu0 0.0
    %229 = vmatpush1.msra.mxu0 0.0
    %230 = vmatprep.subr.mxu0 0.0
    %231 = vmatpush1.msra.mxu0 0.0
    %232 = vmatprep.subr.mxu0 0.0
    %233 = vmatpush1.msra.mxu0 0.0
    %234 = vmatprep.subr.mxu0 0.0
    %235 = vmatpush1.msra.mxu0 0.0
    %236 = vmatprep.subr.mxu0 0.0
    %237 = vmatpush1.msra.mxu0 0.0
    %238 = vmatprep.mubr.f32.mxu0 0.0
    %239 = vmatmul.mubr.f32.gmra.mrb[0].mxu0 %v92
    %v240 = vpop.f32.mrb[0].mxu0
    %v241 = vadd.f32 %v86, %v240
    %v242 = vpop.f32.mrb[0].mxu0
    %243 = vmatprep.mubr.f32.mxu0 0.0
    %244 = vmatmul.mubr.f32.gmra.mrb[0].mxu0 %v95
    %v245 = vpop.f32.mrb[0].mxu0
    %v246 = vadd.f32 %v86, %v245
    %v247 = vpop.f32.mrb[0].mxu0
    %248 = vdwg.mxu0
    %v249 = vsub.f32 0.0, %v164
    %v250 = vsub.f32 0.0, %v170
    %v251 = vmax.f32 %v249, 0.0
    %v252 = vmax.f32 %v250, 0.0
    %vm253 = vcmp.ne.f32.partialorder %v249, %v249
    %vm254 = vcmp.ne.f32.partialorder %v250, %v250
    %v255 = vadd.f32 %v249, 0.0
    %v256 = vadd.f32 %v250, 0.0
    %v257 = vand.u32 2147483647, %v249
    %v258 = vand.u32 2147483647, %v250
    %v259 = vsub.f32 0.0, %v257
    %v260 = vsub.f32 0.0, %v258
    %v261 = vmul.f32 %v259, 1.442695
    %v262 = vpow.pop %v261
    %v263 = vmul.f32 %v260, 1.442695
    %v264 = vpow.pop %v263
    %v265 = vadd.f32 %v262, 1.0
    %v266 = vlog2.pop %v265
    %v267 = vmul.f32 %v266, 0.6931472
    %v268 = vmul.f32 -0.5, %v262
    %v269 = vadd.f32 %v268, 1.0
    %v270 = vmul.f32 %v269, %v262
    %v271 = vand.u32 2147483647, %v262
    %vm272 = vcmp.lt.f32.partialorder %v271, 0.0004427343
    %v273 = vsel %vm272, %v270, %v267
    %v274 = vadd.f32 %v264, 1.0
    %v275 = vlog2.pop %v274
    %v276 = vmul.f32 %v275, 0.6931472
    %v277 = vmul.f32 -0.5, %v264
    %v278 = vadd.f32 %v277, 1.0
    %v279 = vmul.f32 %v278, %v264
    %v280 = vand.u32 2147483647, %v264
    %vm281 = vcmp.lt.f32.partialorder %v280, 0.0004427343
    %v282 = vsel %vm281, %v279, %v276
    %v283 = vadd.f32 %v251, %v273
    %v284 = vadd.f32 %v252, %v282
    %v285 = vsel %vm253, %v255, %v283
    %v286 = vsel %vm254, %v256, %v284
    %v287 = vsub.f32 0.0, %v285
    %v288 = vsub.f32 0.0, %v286
    %v289 = vsub.f32 0.0, %v166
    %v290 = vsub.f32 0.0, %v172
    %v291 = vmax.f32 %v289, 0.0
    %v292 = vmax.f32 %v290, 0.0
    %vm293 = vcmp.ne.f32.partialorder %v289, %v289
    %vm294 = vcmp.ne.f32.partialorder %v290, %v290
    %v295 = vadd.f32 %v289, 0.0
    %v296 = vadd.f32 %v290, 0.0
    %v297 = vand.u32 2147483647, %v289
    %v298 = vand.u32 2147483647, %v290
    %v299 = vsub.f32 0.0, %v297
    %v300 = vsub.f32 0.0, %v298
    %v301 = vmul.f32 %v299, 1.442695
    %v302 = vpow.pop %v301
    %v303 = vmul.f32 %v300, 1.442695
    %v304 = vpow.pop %v303
    %v305 = vadd.f32 %v302, 1.0
    %v306 = vlog2.pop %v305
    %v307 = vmul.f32 %v306, 0.6931472
    %v308 = vmul.f32 -0.5, %v302
    %v309 = vadd.f32 %v308, 1.0
    %v310 = vmul.f32 %v309, %v302
    %v311 = vand.u32 2147483647, %v302
    %vm312 = vcmp.lt.f32.partialorder %v311, 0.0004427343
    %v313 = vsel %vm312, %v310, %v307
    %v314 = vadd.f32 %v304, 1.0
    %v315 = vlog2.pop %v314
    %v316 = vmul.f32 %v315, 0.6931472
    %v317 = vmul.f32 -0.5, %v304
    %v318 = vadd.f32 %v317, 1.0
    %v319 = vmul.f32 %v318, %v304
    %v320 = vand.u32 2147483647, %v304
    %vm321 = vcmp.lt.f32.partialorder %v320, 0.0004427343
    %v322 = vsel %vm321, %v319, %v316
    %v323 = vadd.f32 %v291, %v313
    %v324 = vadd.f32 %v292, %v322
    %v325 = vsel %vm293, %v295, %v323
    %v326 = vsel %vm294, %v296, %v324
    %v327 = vsub.f32 0.0, %v325
    %v328 = vsub.f32 0.0, %v326
    %vm329 = vcmp.ge.f32.partialorder %v241, 0.0
    %vm330 = vcmp.ge.f32.partialorder %v246, 0.0
    %v331 = vmax.f32 %v241, 0.0
    %v332 = vmax.f32 %v246, 0.0
    %v333 = vadd.f32 %v331, 0.5
    %v334 = vadd.f32 %v332, 0.5
    %v335 = vlog2.pop %v333
    %v336 = vmul.f32 %v335, 0.6931472
    %v337 = vlog2.pop %v334
    %v338 = vmul.f32 %v337, 0.6931472
    %v339 = vsub.f32 0.0, %v241
    %v340 = vsub.f32 0.0, %v246
    %v341 = vmax.f32 %v339, 0.0
    %v342 = vmax.f32 %v340, 0.0
    %vm343 = vcmp.ne.f32.partialorder %v339, %v339
    %vm344 = vcmp.ne.f32.partialorder %v340, %v340
    %v345 = vadd.f32 %v339, 0.0
    %v346 = vadd.f32 %v340, 0.0
    %v347 = vand.u32 2147483647, %v339
    %v348 = vand.u32 2147483647, %v340
    %v349 = vsub.f32 0.0, %v347
    %v350 = vsub.f32 0.0, %v348
    %v351 = vmul.f32 %v349, 1.442695
    %v352 = vpow.pop %v351
    %v353 = vmul.f32 %v350, 1.442695
    %v354 = vpow.pop %v353
    %v355 = vadd.f32 %v352, 1.0
    %v356 = vlog2.pop %v355
    %v357 = vmul.f32 %v356, 0.6931472
    %v358 = vmul.f32 -0.5, %v352
    %v359 = vadd.f32 %v358, 1.0
    %v360 = vmul.f32 %v359, %v352
    %v361 = vand.u32 2147483647, %v352
    %vm362 = vcmp.lt.f32.partialorder %v361, 0.0004427343
    %v363 = vsel %vm362, %v360, %v357
    %v364 = vadd.f32 %v354, 1.0
    %v365 = vlog2.pop %v364
    %v366 = vmul.f32 %v365, 0.6931472
    %v367 = vmul.f32 -0.5, %v354
    %v368 = vadd.f32 %v367, 1.0
    %v369 = vmul.f32 %v368, %v354
    %v370 = vand.u32 2147483647, %v354
    %vm371 = vcmp.lt.f32.partialorder %v370, 0.0004427343
    %v372 = vsel %vm371, %v369, %v366
    %v373 = vadd.f32 %v341, %v363
    %v374 = vadd.f32 %v342, %v372
    %v375 = vsel %vm343, %v345, %v373
    %v376 = vsel %vm344, %v346, %v374
    %v377 = vsub.f32 0.0, %v375
    %v378 = vsub.f32 0.0, %v376
    %v379 = vsel %vm329, %v336, %v377
    %v380 = vsel %vm330, %v338, %v378
    %v381 = vrot.slane %v287, 7
    %v382 = vrot.slane %v288, 7
    %v383 = vlaneseq
    %v384 = vshrl.u32 %v383, 7
    %vm385 = vcmp.lt.s32.totalorder %v384, 1
    %v386 = vsel %vm385, %v381, %v382
    %v387 = vsel %vm385, %v382, %v381
    %v388 = vld [vmem:[#allocation7] sm:$0xff]
    %v389 = vld [vmem:[#allocation7 + $0x8] sm:$0xff]
    %v390 = vmul.f32 %v387, %v388
    %v391 = vmul.f32 %v386, %v389
    %v392 = vadd.f32 %v287, %v390
    %v393 = vadd.f32 %v288, %v391
    %v394 = vrot.slane %v392, 6
    %v395 = vrot.slane %v393, 6
    %vm396 = vcmp.lt.s32.totalorder %v384, 2
    %v397 = vsel %vm396, %v394, %v395
    %v398 = vsel %vm396, %v395, %v394
    %s399 = scalar_lea.vmem [#allocation7], 16
    %v400 = vld [vmem:[%s399] sm:$0xff]
    %v401 = vld [vmem:[%s399 + $0x8] sm:$0xff]
    %v402 = vmul.f32 %v398, %v400
    %v403 = vmul.f32 %v397, %v401
    %v404 = vadd.f32 %v392, %v402
    %v405 = vadd.f32 %v393, %v403
    %v406 = vrot.slane %v404, 4
    %v407 = vrot.slane %v405, 4
    %vm408 = vcmp.lt.s32.totalorder %v384, 4
    %v409 = vsel %vm408, %v406, %v407
    %v410 = vsel %vm408, %v407, %v406
    %s411 = scalar_lea.vmem [#allocation7], 32
    %v412 = vld [vmem:[%s411] sm:$0xff]
    %v413 = vld [vmem:[%s411 + $0x8] sm:$0xff]
    %v414 = vmul.f32 %v410, %v412
    %v415 = vmul.f32 %v409, %v413
    %v416 = vadd.f32 %v404, %v414
    %v417 = vadd.f32 %v405, %v415
    %v418 = vadd.f32 %v327, %v379
    %v419 = vadd.f32 %v328, %v380
    %v420 = vsub.f32 %v418, %v416
    %v421 = vsub.f32 %v419, %v417
    %v422 = vmax.f32 %v420, %v421
    %v423 = vrot.slane %v422, 4
    %v424 = vmax.f32 %v422, %v423
    %v425 = vrot.slane %v424, 2
    %v426 = vmax.f32 %v424, %v425
    %v427 = vrot.slane %v426, 1
    %v428 = vmax.f32 %v426, %v427
    %v429 = vmax.f32 %v428, -0.6931472
    %v430 = vsub.f32 %v420, %v429
    %v431 = vsub.f32 %v421, %v429
    %v432 = vmul.f32 %v430, 1.442695
    %v433 = vpow.pop %v432
    %v434 = vmul.f32 %v431, 1.442695
    %v435 = vpow.pop %v434
    %v436 = vrot.slane %v433, 7
    %v437 = vrot.slane %v435, 7
    %v438 = vsel %vm385, %v436, %v437
    %v439 = vsel %vm385, %v437, %v436
    %v440 = vmul.f32 %v439, %v388
    %v441 = vmul.f32 %v438, %v389
    %v442 = vadd.f32 %v433, %v440
    %v443 = vadd.f32 %v435, %v441
    %v444 = vrot.slane %v442, 6
    %v445 = vrot.slane %v443, 6
    %v446 = vsel %vm396, %v444, %v445
    %v447 = vsel %vm396, %v445, %v444
    %v448 = vmul.f32 %v447, %v400
    %v449 = vmul.f32 %v446, %v401
    %v450 = vadd.f32 %v442, %v448
    %v451 = vadd.f32 %v443, %v449
    %v452 = vrot.slane %v450, 4
    %v453 = vrot.slane %v451, 4
    %v454 = vsel %vm408, %v452, %v453
    %v455 = vsel %vm408, %v453, %v452
    %v456 = vmul.f32 %v455, %v412
    %v457 = vmul.f32 %v454, %v413
    %v458 = vadd.f32 %v450, %v456
    %v459 = vadd.f32 %v451, %v457
    %v460 = vsub.f32 -0.6931472, %v429
    %v461 = vmul.f32 %v460, 1.442695
    %v462 = vpow.pop %v461
    %v463 = vadd.f32 %v458, %v462
    %v464 = vadd.f32 %v459, %v462
    %v465 = vadd.f32 %v416, %v429
    %v466 = vadd.f32 %v417, %v429
    %v467 = vmul.f32 %v465, 1.442695
    %v468 = vpow.pop %v467
    %v469 = vmul.f32 %v466, 1.442695
    %v470 = vpow.pop %v469
    %v471 = vmul.f32 %v468, %v463
    %v472 = vmul.f32 %v470, %v464
    %473 = vst.msk [vmem:[#allocation8] sm:$0xff] %vm90, %v471
    %474 = vst.msk [vmem:[#allocation8 + $0x8] sm:$0xff] %vm90, %v472
    // Predicated region
    $region30: #{minlstm_forward.1} parent=1 // pred_check
      _
    $region31: #{minlstm_forward.1} parent=1 // pred_check_branch
      %476 = sbr.rel (0) target = $region33
    $region32: #{minlstm_forward.1} parent=1 // pred_region
      %s478 = ssub.s32 256, 256
      %479 = vsyncadd [#allocation4], %s478
      %s480 = sshll.u32 [#allocation8], 4
      %s481 = int_to_ptr.vmem [resolvable:$true] %s480
      %486 = dma.vmem_to_hbm [thread:$0]  %s481, 256, %s4, [#allocation4], 128, 128, 8
    $region33: #{minlstm_forward.1} parent=1 // pred_fallthru
      _
    // Predicated region
    $region34: #{minlstm_forward.1} parent=1 // pred_check
      _
    $region35: #{minlstm_forward.1} parent=1 // pred_check_branch
      %488 = sbr.rel (0) target = $region37
    $region36: #{minlstm_forward.1} parent=1 // pred_region
      %489 = dma.done [#allocation4], 256
    $region37: #{minlstm_forward.1} parent=1 // pred_fallthru
      _
    %490 = vsyncpa [#allocation3], 1
    %491 = vsyncpa [#allocation6], 1
    %492 = vsyncpa [#allocation4], 1

</llo_original>
